<compile_context>
chip_gen: v7x
topology: tpu7x:2x2x1
jax: 0.10.0
libtpu: 0.0.40
codegen_flags: <defaults>
</compile_context>

<pallas_src>
import functools

import numpy as np
import jax
import jax.numpy as jnp
from jax import lax
from jax.experimental import pallas as pl
from jax.experimental.pallas import tpu as pltpu


# ----------------------------- Pallas kernel ------------------------------ #

def _gram(a, b):
    # a: [M, D], b: [N, D] -> a @ b.T on the MXU without an explicit transpose.
    return lax.dot_general(a, b, (((1,), (1,)), ((), ())),
                           preferred_element_type=jnp.float32)


def _lmmd_kernel(src_ref, tgt_ref, sm_ref, svec_ref, tm_ref, tvec_ref,
                 margin_ref, loss_ref, *, batch_size, kernel_mul, kernel_num,
                 fix_sigma, k):
    # Raw-dtype views feed the MXU (bf16 inputs would stay bf16 there, f32
    # accumulation); all elementwise math is float32 (v5e VPU/EUP have no bf16).
    # Note: casting f32 Gram operands to bf16 is only worth it for D >~ 512 and
    # worsens cancellation in the distance formula, so it is skipped here.
    src_raw = src_ref[...]
    tgt_raw = tgt_ref[...]
    src = src_raw.astype(jnp.float32)                     # [B, D]
    tgt = tgt_raw.astype(jnp.float32)                     # [B, D]
    B = batch_size
    n = 2 * B

    # Per-row squared norms: shared by the Gram-form distances and bandwidth.
    sq_s = jnp.sum(src * src, axis=-1, keepdims=True)     # [B, 1]
    sq_t = jnp.sum(tgt * tgt, axis=-1, keepdims=True)     # [B, 1]

    # Only the 3 quadrants the loss uses (SS, TT, ST); TS is never needed.
    g_ss = _gram(src_raw, src_raw)                        # [B, B]
    g_tt = _gram(tgt_raw, tgt_raw)                        # [B, B]
    g_st = _gram(src_raw, tgt_raw)                        # [B, B]

    # ||x_i - x_j||^2 = ||x_i||^2 + ||x_j||^2 - 2<x_i, x_j>, clamped >= 0 so
    # cancellation can't go negative (the reference expand/subtract form is
    # exactly non-negative).
    l2_ss = jnp.maximum(sq_s + sq_s.T - 2.0 * g_ss, 0.0)
    l2_tt = jnp.maximum(sq_t + sq_t.T - 2.0 * g_tt, 0.0)
    l2_st = jnp.maximum(sq_s + sq_t.T - 2.0 * g_st, 0.0)

    if fix_sigma is not None:
        bandwidth = jnp.float32(fix_sigma)
    else:
        # Closed form for the full-(2B x 2B) distance-matrix sum:
        #   sum_{i,j} ||x_i - x_j||^2 = 2*n*sum_i ||x_i||^2 - 2*||sum_i x_i||^2
        sumsq = jnp.sum(sq_s) + jnp.sum(sq_t)
        colsum = (jnp.sum(src, axis=0, keepdims=True)
                  + jnp.sum(tgt, axis=0, keepdims=True))  # [1, D]
        sum_l2 = jnp.maximum(
            2.0 * jnp.float32(n) * sumsq - 2.0 * jnp.sum(colsum * colsum), 0.0)
        bandwidth = sum_l2 / jnp.float32(n * n - n)
    bandwidth = bandwidth / jnp.float32(kernel_mul ** (kernel_num // 2))

    # Hoist all bandwidth divides out of the elementwise path: one scalar
    # reciprocal, then each RBF term is a full-tile mul (+ exp / squaring).
    inv_bw = 1.0 / bandwidth                              # scalar (done once)
    neg_coeffs = [-(1.0 / (kernel_mul ** i)) for i in range(kernel_num)]

    if float(kernel_mul) == 2.0:
        # EUP-saving path: a single exp of the smallest-magnitude exponent,
        # then each coarser bandwidth is one VPU squaring:
        #   exp(-l2/(bw*2^i)) = exp(-l2/(bw*2^(i+1)))^2
        # Rounding amplification is <= ~2^(kernel_num-1) ulp (~2e-6 rel).
        def rbf_sum(l2):
            e = jnp.exp(l2 * (neg_coeffs[-1] * inv_bw))   # i = kernel_num-1 term
            acc = e
            for _ in range(kernel_num - 1):
                e = e * e
                acc = acc + e
            return acc
    else:
        # General fallback: kernel_num exps (bandwidth ratios not powers of 2).
        def rbf_sum(l2):
            acc = jnp.exp(l2 * (neg_coeffs[0] * inv_bw))  # i = 0 term (no zeros+add)
            for c in neg_coeffs[1:]:
                acc = acc + jnp.exp(l2 * (c * inv_bw))
            return acc

    k_ss = rbf_sum(l2_ss)
    k_tt = rbf_sum(l2_tt)
    k_st = rbf_sum(l2_st)

    # Class-weight quadrants built on-chip from tiny [B, C] vectors (three
    # small MXU matmuls) instead of streaming three [B, B] f32 matrices.
    # /count is already folded into sm/tm by cal_weight.
    w_ss = _gram(sm_ref[...].astype(jnp.float32), svec_ref[...].astype(jnp.float32))
    w_tt = _gram(tm_ref[...].astype(jnp.float32), tvec_ref[...].astype(jnp.float32))
    w_st = _gram(sm_ref[...].astype(jnp.float32), tvec_ref[...].astype(jnp.float32))

    conf = jax.nn.sigmoid(margin_ref[...].astype(jnp.float32) * k)   # [B, 1]

    loss = jnp.sum(conf * w_ss * k_ss
                   + w_tt * k_tt
                   - 2.0 * jnp.sqrt(conf) * w_st * k_st)

    # torch: if any NaN appears in the summed kernels, the returned loss is 0.
    # Any NaN in the used kernel quadrants propagates into `loss`, so a scalar
    # isnan check replaces a full-tile isnan + cross-lane reduction.
    # TODO(synk): this also zeroes the loss if the weights / margin contain NaN
    # (the torch reference would return NaN there), and the reference returns a
    # bare scalar instead of the 4-tuple in the NaN case.
    has_nan = jnp.isnan(loss)
    loss_ref[0, 0] = jnp.where(has_nan, jnp.float32(0.0), loss)


def lmmd_loss_pallas(source, target, sm, s_vec, tm, t_vec, margin, *,
                     kernel_mul, kernel_num, fix_sigma, k):
    B, _ = source.shape
    # No wrapper-side feature padding: Mosaic lane-pads the VMEM tile and masks
    # padded lanes in both the row-norm reduction and the MXU contraction, so a
    # standalone jnp.pad would only add an extra HBM round trip.
    kernel = functools.partial(
        _lmmd_kernel,
        batch_size=B,
        kernel_mul=float(kernel_mul),
        kernel_num=int(kernel_num),
        fix_sigma=fix_sigma,
        k=float(k),
    )
    vmem = pl.BlockSpec(memory_space=pltpu.MemorySpace.VMEM)
    # TODO(synk): for production-sized B (thousands), grid over (row_tile,
    # col_tile) with all three quadrants computed per step (amortizes the
    # feature DMAs 3x), reduction (col) axis last, a pl.when-gated scalar
    # accumulator, the data-dependent bandwidth computed in the wrapper and
    # passed via scalar prefetch, the weight quadrants still built per tile
    # from the [B, C] vectors, tile ~512 with an explicit vmem_limit_bytes on
    # v7x (64 MiB phys / 32 MiB scoped), tile ~256 or a raised limit on v5e
    # (16 MiB scoped default), and per-row-tile partial-sum outputs on a
    # "parallel" row axis so v7x's two TensorCores both contribute.  A single
    # ungridded call is right at toy sizes.
    loss = pl.pallas_call(
        kernel,
        out_shape=jax.ShapeDtypeStruct((1, 1), jnp.float32),
        in_specs=[vmem, vmem, vmem, vmem, vmem, vmem, vmem],
        out_specs=pl.BlockSpec(memory_space=pltpu.MemorySpace.SMEM),
    )(source, target, sm, s_vec, tm, t_vec, margin)
    return loss[0, 0]


# ------------------------------ JAX glue ---------------------------------- #

def cal_weight(source_label, target_logits, num_class):
    """JAX port of DFLMMDLoss.cal_weight (numpy host code in the reference).

    Returns the masked/normalized per-class vectors instead of the dense
    [B, B] weight matrices; the kernel rebuilds w_ss/w_tt/w_st on-chip as
      w_ss = sm @ s_vec.T, w_tt = tm @ t_vec.T, w_st = sm @ t_vec.T
    (the /count normalization is folded into sm/tm).
    """
    s_onehot = jax.nn.one_hot(source_label, num_class, dtype=jnp.float32)   # [B, C]
    s_sum = jnp.sum(s_onehot, axis=0, keepdims=True)                        # [1, C]
    s_sum = jnp.where(s_sum == 0, 100.0, s_sum)
    s_vec = s_onehot / s_sum

    t_label = jnp.argmax(target_logits, axis=1)
    t_sum = jnp.sum(target_logits, axis=0, keepdims=True)
    t_sum = jnp.where(t_sum == 0, 100.0, t_sum)
    t_vec = target_logits / t_sum

    present_s = jnp.sum(jax.nn.one_hot(source_label, num_class), axis=0) > 0
    present_t = jnp.sum(jax.nn.one_hot(t_label, num_class), axis=0) > 0
    mask = jnp.logical_and(present_s, present_t).astype(jnp.float32)        # [C]
    count = jnp.sum(mask)
    denom = jnp.where(count == 0, 1.0, count)

    sm = (s_vec * mask) / denom                                             # [B, C]
    tm = (t_vec * mask) / denom                                             # [B, C]
    return (sm.astype(jnp.float32), s_vec.astype(jnp.float32),
            tm.astype(jnp.float32), t_vec.astype(jnp.float32))


def _weight_means(sm, s_vec, tm, t_vec, batch_size):
    # mean(A @ B.T) over a [B, B] matrix == dot(colsum(A), colsum(B)) / B^2,
    # so the diagnostic means never need the dense weight matrices.
    cs_sm = jnp.sum(sm, axis=0)
    cs_s = jnp.sum(s_vec, axis=0)
    cs_tm = jnp.sum(tm, axis=0)
    cs_t = jnp.sum(t_vec, axis=0)
    inv_b2 = 1.0 / float(batch_size * batch_size)
    m_ss = jnp.dot(cs_sm, cs_s) * inv_b2
    m_tt = jnp.dot(cs_tm, cs_t) * inv_b2
    m_st = jnp.dot(cs_sm, cs_t) * inv_b2
    return m_ss, m_tt, m_st


class LambdaSheduler:
    def __init__(self, gamma=1.0, max_iter=1000):
        self.gamma = gamma
        self.max_iter = max_iter
        self.curr_iter = 0

    def lamb(self):
        p = self.curr_iter / self.max_iter
        return float(2.0 / (1.0 + np.exp(-self.gamma * p)) - 1.0)

    def step(self):
        self.curr_iter = min(self.curr_iter + 1, self.max_iter)


class DFLMMDLoss(LambdaSheduler):
    def __init__(self, num_class, k, kernel_type='rbf', kernel_mul=2.0,
                 kernel_num=5, fix_sigma=None, gamma=1.0, max_iter=1000, **kwargs):
        super().__init__(gamma=gamma, max_iter=max_iter)
        self.kernel_type = kernel_type
        self.kernel_mul = kernel_mul
        self.kernel_num = kernel_num
        self.fix_sigma = fix_sigma
        self.num_class = num_class
        self.k = k

    def __call__(self, source, target, source_label, target_logits, src_conf_margin):
        if self.kernel_type == 'linear':
            raise NotImplementedError('Linear kernel is not supported yet.')
        B = source.shape[0]
        sm, s_vec, tm, t_vec = cal_weight(source_label, target_logits, self.num_class)
        loss = lmmd_loss_pallas(
            source, target, sm, s_vec, tm, t_vec, src_conf_margin,
            kernel_mul=self.kernel_mul,
            kernel_num=self.kernel_num,
            fix_sigma=self.fix_sigma,
            k=self.k,
        )
        m_ss, m_tt, m_st = _weight_means(sm, s_vec, tm, t_vec, B)
        lamb = self.lamb()
        self.step()
        loss = loss * lamb
        return loss, m_ss, m_tt, m_st


class DFTransferLoss:
    def __init__(self, loss_type, **kwargs):
        self.loss_type = loss_type
        if loss_type == 'lmmd':
            self.loss_func = DFLMMDLoss(**kwargs)
        else:
            print('WARNING: No valid transfer loss function is used.')
            self.loss_func = lambda x, y, **kw: 0

    def forward(self, source, target, **kwargs):
        return self.loss_func(source, target, **kwargs)


# -------------------------------- main ------------------------------------ #

if __name__ == "__main__":
    B, D, C = 8, 32, 4

    key = jax.random.PRNGKey(0)
    k_src, k_tgt, k_lab, k_log, k_mar = jax.random.split(key, 5)

    source = jax.random.normal(k_src, (B, D), dtype=jnp.float32)
    target = jax.random.normal(k_tgt, (B, D), dtype=jnp.float32)
    source_label = jax.random.randint(k_lab, (B,), 0, C, dtype=jnp.int32)
    target_logits = jax.nn.softmax(
        jax.random.normal(k_log, (B, C), dtype=jnp.float32), axis=-1)
    src_conf_margin = jax.random.uniform(k_mar, (B, 1), dtype=jnp.float32)

    transfer = DFTransferLoss('lmmd', num_class=C, k=3.0,
                              kernel_mul=2.0, kernel_num=5, fix_sigma=None,
                              gamma=1.0, max_iter=1000)

    # Run two iterations (first iteration has lamb == 0, as in the reference).
    for _ in range(2):
        loss, m_ss, m_tt, m_st = transfer.forward(
            source, target,
            source_label=source_label,
            target_logits=target_logits,
            src_conf_margin=src_conf_margin,
        )
    jax.block_until_ready((loss, m_ss, m_tt, m_st))
    print("KERNEL_OK")
</pallas_src>

<mosaic_0001>
module attributes {stable_mosaic.version = 11 : i64} {
  func.func @_lmmd_kernel(%arg0: memref<8x32xf32, #tpu.memory_space<vmem>>, %arg1: memref<8x32xf32, #tpu.memory_space<vmem>>, %arg2: memref<8x4xf32, #tpu.memory_space<vmem>>, %arg3: memref<8x4xf32, #tpu.memory_space<vmem>>, %arg4: memref<8x4xf32, #tpu.memory_space<vmem>>, %arg5: memref<8x4xf32, #tpu.memory_space<vmem>>, %arg6: memref<8x1xf32, #tpu.memory_space<vmem>>, %arg7: memref<1x1xf32, #tpu.memory_space<smem>>) attributes {dimension_semantics = [], scalar_prefetch = 0 : i64, scratch_operands = 0 : i64, tpu.core_type = #tpu.core_type<tc>} {
    %c0 = arith.constant 0 : index
    %c0_0 = arith.constant 0 : index
    %0 = vector.load %arg0[%c0, %c0_0] : memref<8x32xf32, #tpu.memory_space<vmem>>, vector<8x32xf32>
    %c0_1 = arith.constant 0 : index
    %c0_2 = arith.constant 0 : index
    %1 = vector.load %arg1[%c0_1, %c0_2] : memref<8x32xf32, #tpu.memory_space<vmem>>, vector<8x32xf32>
    %2 = arith.mulf %0, %0 : vector<8x32xf32>
    %cst = arith.constant dense<0.000000e+00> : vector<8xf32>
    %3 = vector.multi_reduction <add>, %2, %cst [1] : vector<8x32xf32> to vector<8xf32>
    %4 = vector.shape_cast %3 : vector<8xf32> to vector<8x1xf32>
    %5 = arith.mulf %1, %1 : vector<8x32xf32>
    %cst_3 = arith.constant dense<0.000000e+00> : vector<8xf32>
    %6 = vector.multi_reduction <add>, %5, %cst_3 [1] : vector<8x32xf32> to vector<8xf32>
    %7 = vector.shape_cast %6 : vector<8xf32> to vector<8x1xf32>
    %cst_4 = arith.constant dense<0.000000e+00> : vector<8x8xf32>
    %8 = tpu.matmul %0, %0, %cst_4 {dimension_numbers = #tpu.dot_dimension_numbers<[1], [1], [0], [0], [0, 0, 1, 0], [], []>} : vector<8x32xf32>, vector<8x32xf32>, vector<8x8xf32> -> vector<8x8xf32>
    %cst_5 = arith.constant dense<0.000000e+00> : vector<8x8xf32>
    %9 = tpu.matmul %1, %1, %cst_5 {dimension_numbers = #tpu.dot_dimension_numbers<[1], [1], [0], [0], [0, 0, 1, 0], [], []>} : vector<8x32xf32>, vector<8x32xf32>, vector<8x8xf32> -> vector<8x8xf32>
    %cst_6 = arith.constant dense<0.000000e+00> : vector<8x8xf32>
    %10 = tpu.matmul %0, %1, %cst_6 {dimension_numbers = #tpu.dot_dimension_numbers<[1], [1], [0], [0], [0, 0, 1, 0], [], []>} : vector<8x32xf32>, vector<8x32xf32>, vector<8x8xf32> -> vector<8x8xf32>
    %11 = tpu.transpose %4, [1, 0] : vector<8x1xf32> -> vector<1x8xf32>
    %12 = vector.broadcast %4 : vector<8x1xf32> to vector<8x8xf32>
    %13 = vector.broadcast %11 : vector<1x8xf32> to vector<8x8xf32>
    %14 = arith.addf %12, %13 : vector<8x8xf32>
    %cst_7 = arith.constant 2.000000e+00 : f32
    %15 = vector.broadcast %cst_7 : f32 to vector<8x8xf32>
    %16 = arith.mulf %15, %8 : vector<8x8xf32>
    %17 = arith.subf %14, %16 : vector<8x8xf32>
    %cst_8 = arith.constant 0.000000e+00 : f32
    %18 = vector.broadcast %cst_8 : f32 to vector<8x8xf32>
    %19 = arith.maximumf %17, %18 : vector<8x8xf32>
    %20 = tpu.transpose %7, [1, 0] : vector<8x1xf32> -> vector<1x8xf32>
    %21 = vector.broadcast %7 : vector<8x1xf32> to vector<8x8xf32>
    %22 = vector.broadcast %20 : vector<1x8xf32> to vector<8x8xf32>
    %23 = arith.addf %21, %22 : vector<8x8xf32>
    %cst_9 = arith.constant 2.000000e+00 : f32
    %24 = vector.broadcast %cst_9 : f32 to vector<8x8xf32>
    %25 = arith.mulf %24, %9 : vector<8x8xf32>
    %26 = arith.subf %23, %25 : vector<8x8xf32>
    %cst_10 = arith.constant 0.000000e+00 : f32
    %27 = vector.broadcast %cst_10 : f32 to vector<8x8xf32>
    %28 = arith.maximumf %26, %27 : vector<8x8xf32>
    %29 = tpu.transpose %7, [1, 0] : vector<8x1xf32> -> vector<1x8xf32>
    %30 = vector.broadcast %4 : vector<8x1xf32> to vector<8x8xf32>
    %31 = vector.broadcast %29 : vector<1x8xf32> to vector<8x8xf32>
    %32 = arith.addf %30, %31 : vector<8x8xf32>
    %cst_11 = arith.constant 2.000000e+00 : f32
    %33 = vector.broadcast %cst_11 : f32 to vector<8x8xf32>
    %34 = arith.mulf %33, %10 : vector<8x8xf32>
    %35 = arith.subf %32, %34 : vector<8x8xf32>
    %cst_12 = arith.constant 0.000000e+00 : f32
    %36 = vector.broadcast %cst_12 : f32 to vector<8x8xf32>
    %37 = arith.maximumf %35, %36 : vector<8x8xf32>
    %38 = vector.shape_cast %4 : vector<8x1xf32> to vector<1x8x1xf32>
    %cst_13 = arith.constant dense<0.000000e+00> : vector<1xf32>
    %39 = vector.multi_reduction <add>, %38, %cst_13 [1, 2] : vector<1x8x1xf32> to vector<1xf32>
    %40 = vector.shape_cast %39 : vector<1xf32> to vector<1x1x1xf32>
    %41 = vector.extract %40[0, 0, 0] : f32 from vector<1x1x1xf32>
    %42 = vector.shape_cast %7 : vector<8x1xf32> to vector<1x8x1xf32>
    %cst_14 = arith.constant dense<0.000000e+00> : vector<1xf32>
    %43 = vector.multi_reduction <add>, %42, %cst_14 [1, 2] : vector<1x8x1xf32> to vector<1xf32>
    %44 = vector.shape_cast %43 : vector<1xf32> to vector<1x1x1xf32>
    %45 = vector.extract %44[0, 0, 0] : f32 from vector<1x1x1xf32>
    %46 = arith.addf %41, %45 : f32
    %cst_15 = arith.constant dense<0.000000e+00> : vector<32xf32>
    %47 = vector.multi_reduction <add>, %0, %cst_15 [0] : vector<8x32xf32> to vector<32xf32>
    %48 = vector.shape_cast %47 : vector<32xf32> to vector<1x32xf32>
    %cst_16 = arith.constant dense<0.000000e+00> : vector<32xf32>
    %49 = vector.multi_reduction <add>, %1, %cst_16 [0] : vector<8x32xf32> to vector<32xf32>
    %50 = vector.shape_cast %49 : vector<32xf32> to vector<1x32xf32>
    %51 = arith.addf %48, %50 : vector<1x32xf32>
    %cst_17 = arith.constant 2.000000e+00 : f32
    %cst_18 = arith.constant 1.600000e+01 : f32
    %52 = arith.mulf %cst_17, %cst_18 : f32
    %53 = arith.mulf %52, %46 : f32
    %54 = arith.mulf %51, %51 : vector<1x32xf32>
    %55 = vector.shape_cast %54 : vector<1x32xf32> to vector<1x1x32xf32>
    %cst_19 = arith.constant dense<0.000000e+00> : vector<1xf32>
    %56 = vector.multi_reduction <add>, %55, %cst_19 [1, 2] : vector<1x1x32xf32> to vector<1xf32>
    %57 = vector.shape_cast %56 : vector<1xf32> to vector<1x1x1xf32>
    %58 = vector.extract %57[0, 0, 0] : f32 from vector<1x1x1xf32>
    %cst_20 = arith.constant 2.000000e+00 : f32
    %59 = arith.mulf %cst_20, %58 : f32
    %60 = arith.subf %53, %59 : f32
    %cst_21 = arith.constant 0.000000e+00 : f32
    %61 = arith.maximumf %60, %cst_21 : f32
    %cst_22 = arith.constant 2.400000e+02 : f32
    %62 = arith.divf %61, %cst_22 : f32
    %cst_23 = arith.constant 4.000000e+00 : f32
    %63 = arith.divf %62, %cst_23 : f32
    %cst_24 = arith.constant 1.000000e+00 : f32
    %64 = arith.divf %cst_24, %63 : f32
    %cst_25 = arith.constant -6.250000e-02 : f32
    %65 = arith.mulf %cst_25, %64 : f32
    %66 = vector.broadcast %65 : f32 to vector<8x8xf32>
    %67 = arith.mulf %19, %66 : vector<8x8xf32>
    %68 = math.exp %67 : vector<8x8xf32>
    %69 = arith.mulf %68, %68 : vector<8x8xf32>
    %70 = arith.addf %68, %69 : vector<8x8xf32>
    %71 = arith.mulf %69, %69 : vector<8x8xf32>
    %72 = arith.addf %70, %71 : vector<8x8xf32>
    %73 = arith.mulf %71, %71 : vector<8x8xf32>
    %74 = arith.addf %72, %73 : vector<8x8xf32>
    %75 = arith.mulf %73, %73 : vector<8x8xf32>
    %76 = arith.addf %74, %75 : vector<8x8xf32>
    %cst_26 = arith.constant -6.250000e-02 : f32
    %77 = arith.mulf %cst_26, %64 : f32
    %78 = vector.broadcast %77 : f32 to vector<8x8xf32>
    %79 = arith.mulf %28, %78 : vector<8x8xf32>
    %80 = math.exp %79 : vector<8x8xf32>
    %81 = arith.mulf %80, %80 : vector<8x8xf32>
    %82 = arith.addf %80, %81 : vector<8x8xf32>
    %83 = arith.mulf %81, %81 : vector<8x8xf32>
    %84 = arith.addf %82, %83 : vector<8x8xf32>
    %85 = arith.mulf %83, %83 : vector<8x8xf32>
    %86 = arith.addf %84, %85 : vector<8x8xf32>
    %87 = arith.mulf %85, %85 : vector<8x8xf32>
    %88 = arith.addf %86, %87 : vector<8x8xf32>
    %cst_27 = arith.constant -6.250000e-02 : f32
    %89 = arith.mulf %cst_27, %64 : f32
    %90 = vector.broadcast %89 : f32 to vector<8x8xf32>
    %91 = arith.mulf %37, %90 : vector<8x8xf32>
    %92 = math.exp %91 : vector<8x8xf32>
    %93 = arith.mulf %92, %92 : vector<8x8xf32>
    %94 = arith.addf %92, %93 : vector<8x8xf32>
    %95 = arith.mulf %93, %93 : vector<8x8xf32>
    %96 = arith.addf %94, %95 : vector<8x8xf32>
    %97 = arith.mulf %95, %95 : vector<8x8xf32>
    %98 = arith.addf %96, %97 : vector<8x8xf32>
    %99 = arith.mulf %97, %97 : vector<8x8xf32>
    %100 = arith.addf %98, %99 : vector<8x8xf32>
    %c0_28 = arith.constant 0 : index
    %c0_29 = arith.constant 0 : index
    %101 = vector.load %arg2[%c0_28, %c0_29] : memref<8x4xf32, #tpu.memory_space<vmem>>, vector<8x4xf32>
    %c0_30 = arith.constant 0 : index
    %c0_31 = arith.constant 0 : index
    %102 = vector.load %arg3[%c0_30, %c0_31] : memref<8x4xf32, #tpu.memory_space<vmem>>, vector<8x4xf32>
    %cst_32 = arith.constant dense<0.000000e+00> : vector<8x8xf32>
    %103 = tpu.matmul %101, %102, %cst_32 {dimension_numbers = #tpu.dot_dimension_numbers<[1], [1], [0], [0], [0, 0, 1, 0], [], []>} : vector<8x4xf32>, vector<8x4xf32>, vector<8x8xf32> -> vector<8x8xf32>
    %c0_33 = arith.constant 0 : index
    %c0_34 = arith.constant 0 : index
    %104 = vector.load %arg4[%c0_33, %c0_34] : memref<8x4xf32, #tpu.memory_space<vmem>>, vector<8x4xf32>
    %c0_35 = arith.constant 0 : index
    %c0_36 = arith.constant 0 : index
    %105 = vector.load %arg5[%c0_35, %c0_36] : memref<8x4xf32, #tpu.memory_space<vmem>>, vector<8x4xf32>
    %cst_37 = arith.constant dense<0.000000e+00> : vector<8x8xf32>
    %106 = tpu.matmul %104, %105, %cst_37 {dimension_numbers = #tpu.dot_dimension_numbers<[1], [1], [0], [0], [0, 0, 1, 0], [], []>} : vector<8x4xf32>, vector<8x4xf32>, vector<8x8xf32> -> vector<8x8xf32>
    %c0_38 = arith.constant 0 : index
    %c0_39 = arith.constant 0 : index
    %107 = vector.load %arg2[%c0_38, %c0_39] : memref<8x4xf32, #tpu.memory_space<vmem>>, vector<8x4xf32>
    %c0_40 = arith.constant 0 : index
    %c0_41 = arith.constant 0 : index
    %108 = vector.load %arg5[%c0_40, %c0_41] : memref<8x4xf32, #tpu.memory_space<vmem>>, vector<8x4xf32>
    %cst_42 = arith.constant dense<0.000000e+00> : vector<8x8xf32>
    %109 = tpu.matmul %107, %108, %cst_42 {dimension_numbers = #tpu.dot_dimension_numbers<[1], [1], [0], [0], [0, 0, 1, 0], [], []>} : vector<8x4xf32>, vector<8x4xf32>, vector<8x8xf32> -> vector<8x8xf32>
    %c0_43 = arith.constant 0 : index
    %c0_44 = arith.constant 0 : index
    %110 = vector.load %arg6[%c0_43, %c0_44] : memref<8x1xf32, #tpu.memory_space<vmem>>, vector<8x1xf32>
    %cst_45 = arith.constant 3.000000e+00 : f32
    %111 = vector.broadcast %cst_45 : f32 to vector<8x1xf32>
    %112 = arith.mulf %110, %111 : vector<8x1xf32>
    %113 = arith.negf %112 : vector<8x1xf32>
    %114 = math.exp %113 : vector<8x1xf32>
    %cst_46 = arith.constant 1.000000e+00 : f32
    %115 = vector.broadcast %cst_46 : f32 to vector<8x1xf32>
    %116 = arith.addf %115, %114 : vector<8x1xf32>
    %117 = arith.divf %115, %116 : vector<8x1xf32>
    %118 = vector.broadcast %117 : vector<8x1xf32> to vector<8x8xf32>
    %119 = arith.mulf %118, %103 : vector<8x8xf32>
    %120 = arith.mulf %119, %76 : vector<8x8xf32>
    %121 = arith.mulf %106, %88 : vector<8x8xf32>
    %122 = arith.addf %120, %121 : vector<8x8xf32>
    %123 = math.sqrt %117 : vector<8x1xf32>
    %cst_47 = arith.constant 2.000000e+00 : f32
    %124 = vector.broadcast %cst_47 : f32 to vector<8x1xf32>
    %125 = arith.mulf %124, %123 : vector<8x1xf32>
    %126 = vector.broadcast %125 : vector<8x1xf32> to vector<8x8xf32>
    %127 = arith.mulf %126, %109 : vector<8x8xf32>
    %128 = arith.mulf %127, %100 : vector<8x8xf32>
    %129 = arith.subf %122, %128 : vector<8x8xf32>
    %130 = vector.shape_cast %129 : vector<8x8xf32> to vector<1x8x8xf32>
    %cst_48 = arith.constant dense<0.000000e+00> : vector<1xf32>
    %131 = vector.multi_reduction <add>, %130, %cst_48 [1, 2] : vector<1x8x8xf32> to vector<1xf32>
    %132 = vector.shape_cast %131 : vector<1xf32> to vector<1x1x1xf32>
    %133 = vector.extract %132[0, 0, 0] : f32 from vector<1x1x1xf32>
    %134 = arith.cmpf one, %133, %133 : f32
    %cst_49 = arith.constant 0.000000e+00 : f32
    %135 = arith.select %134, %cst_49, %133 : f32
    %c0_50 = arith.constant 0 : index
    %c0_51 = arith.constant 0 : index
    %136 = memref.load %arg7[%c0_50, %c0_51] : memref<1x1xf32, #tpu.memory_space<smem>>
    memref.store %135, %arg7[%c0_50, %c0_51] : memref<1x1xf32, #tpu.memory_space<smem>>
    return
  }
}

</mosaic_0001>

<llo_original>
// kernel: tpu_custom_call.1
$region0: #{tpu_custom_call.1}
  #allocation0 [shape = 'u32[]', space=smem, size = 0x4, offset = 0x4, fixed_abs, tag = 'smem constant byte address 0x4 - core index']
  #allocation1 [shape = 'u32[144,128]{1,0:T(1,128)}', space=vmem, size = 0x12000, scoped, tag = 'internal scratch']
  %s0 = inlined_call_operand.vmem [shape: f32[8,32], index: 0, kind: input, shape index: {}]
  %s1 = inlined_call_operand.vmem [shape: f32[8,32], index: 1, kind: input, shape index: {}]
  %s2 = inlined_call_operand.vmem [shape: f32[8,4], index: 2, kind: input, shape index: {}]
  %s3 = inlined_call_operand.vmem [shape: f32[8,4], index: 3, kind: input, shape index: {}]
  %s4 = inlined_call_operand.vmem [shape: f32[8,4], index: 4, kind: input, shape index: {}]
  %s5 = inlined_call_operand.vmem [shape: f32[8,4], index: 5, kind: input, shape index: {}]
  %s6 = inlined_call_operand.vmem [shape: f32[8,1], index: 6, kind: input, shape index: {}]
  %s7 = inlined_call_operand.hbm [shape: f32[1,1], index: 7, kind: output, shape index: {}]
  %s8 = sld [smem:[#allocation0]]
  $region38: #{tpu_custom_call.1} parent=0
    _
  %s10 = ssub.s32 1, %s8
  %s11 = scalar_select 0, %s10, %s8
  $region1: #{tpu_custom_call.1} parent=0
    #allocation2 [shape = 'u8[512]{0}', space=smem, size = 0x200, scoped, tag = 'output window, operand 0, single buffered']
    #allocation3 [shape = 's32[1]{0}', space=sflag, size = 0x4, scoped, tag = 'scoped memory for tpu_custom_call.1']
    %12 = vsyncpa [#allocation3], 0
    // Predicated region
    $region2: #{tpu_custom_call.1} parent=1 // pred_check
      _
    $region3: #{tpu_custom_call.1} parent=1 // pred_check_branch
      %14 = sbr.rel (0) target = $region5
    $region4: #{tpu_custom_call.1} parent=1 // pred_region
      _
    $region5: #{tpu_custom_call.1} parent=1 // pred_fallthru
      _
    // Predicated region
    $region6: #{tpu_custom_call.1} parent=1 // pred_check
      _
    $region7: #{tpu_custom_call.1} parent=1 // pred_check_branch
      %16 = sbr.rel (0) target = $region9
    $region8: #{tpu_custom_call.1} parent=1 // pred_region
      _
    $region9: #{tpu_custom_call.1} parent=1 // pred_fallthru
      _
    // Predicated region
    $region10: #{tpu_custom_call.1} parent=1 // pred_check
      _
    $region11: #{tpu_custom_call.1} parent=1 // pred_check_branch
      %18 = sbr.rel (0) target = $region13
    $region12: #{tpu_custom_call.1} parent=1 // pred_region
      _
    $region13: #{tpu_custom_call.1} parent=1 // pred_fallthru
      _
    // Predicated region
    $region14: #{tpu_custom_call.1} parent=1 // pred_check
      _
    $region15: #{tpu_custom_call.1} parent=1 // pred_check_branch
      %20 = sbr.rel (0) target = $region17
    $region16: #{tpu_custom_call.1} parent=1 // pred_region
      _
    $region17: #{tpu_custom_call.1} parent=1 // pred_fallthru
      _
    // Predicated region
    $region18: #{tpu_custom_call.1} parent=1 // pred_check
      _
    $region19: #{tpu_custom_call.1} parent=1 // pred_check_branch
      %22 = sbr.rel (0) target = $region21
    $region20: #{tpu_custom_call.1} parent=1 // pred_region
      _
    $region21: #{tpu_custom_call.1} parent=1 // pred_fallthru
      _
    // Predicated region
    $region22: #{tpu_custom_call.1} parent=1 // pred_check
      _
    $region23: #{tpu_custom_call.1} parent=1 // pred_check_branch
      %24 = sbr.rel (0) target = $region25
    $region24: #{tpu_custom_call.1} parent=1 // pred_region
      _
    $region25: #{tpu_custom_call.1} parent=1 // pred_fallthru
      _
    // Predicated region
    $region26: #{tpu_custom_call.1} parent=1 // pred_check
      _
    $region27: #{tpu_custom_call.1} parent=1 // pred_check_branch
      %26 = sbr.rel (0) target = $region29
    $region28: #{tpu_custom_call.1} parent=1 // pred_region
      _
    $region29: #{tpu_custom_call.1} parent=1 // pred_fallthru
      _
    %v27 = vld [vmem:[%s0] sm:$0xff]
    %v28 = vld [vmem:[%s1] sm:$0xff]
    %v29 = vmul.f32 %v27, %v27
    %vm30 = vcmask 261120
    %v31 = vsel %vm30, %v29, 0.0
    %32 = vadd.xlane.f32.xlu0 %v31
    %v33 = vpop.xlane.xlu0 %32
    %v34 = vmul.f32 %v28, %v28
    %v35 = vsel %vm30, %v34, 0.0
    %36 = vadd.xlane.f32.xlu0 %v35
    %v37 = vpop.xlane.xlu0 %36
    %v39 = vsel %vm30, %v27, 0
    %41 = vmatprep.subr.mxu0 0.0
    %42 = vmatpush1.xpose.msra.mxu0 %v39
    %43 = vmatprep.subr.mxu0 0.0
    %44 = vmatpush1.xpose.msra.mxu0 0.0
    %45 = vmatprep.subr.mxu0 0.0
    %46 = vmatpush1.xpose.msra.mxu0 0.0
    %47 = vmatprep.subr.mxu0 0.0
    %48 = vmatpush1.xpose.msra.mxu0 0.0
    %49 = vmatprep.subr.mxu0 0.0
    %50 = vmatpush1.xpose.msra.mxu0 0.0
    %51 = vmatprep.subr.mxu0 0.0
    %52 = vmatpush1.xpose.msra.mxu0 0.0
    %53 = vmatprep.subr.mxu0 0.0
    %54 = vmatpush1.xpose.msra.mxu0 0.0
    %55 = vmatprep.subr.mxu0 0.0
    %56 = vmatpush1.xpose.msra.mxu0 0.0
    %57 = vmatprep.subr.mxu0 0.0
    %58 = vmatpush1.xpose.msra.mxu0 0.0
    %59 = vmatprep.subr.mxu0 0.0
    %60 = vmatpush1.xpose.msra.mxu0 0.0
    %61 = vmatprep.subr.mxu0 0.0
    %62 = vmatpush1.xpose.msra.mxu0 0.0
    %63 = vmatprep.subr.mxu0 0.0
    %64 = vmatpush1.xpose.msra.mxu0 0.0
    %65 = vmatprep.subr.mxu0 0.0
    %66 = vmatpush1.xpose.msra.mxu0 0.0
    %67 = vmatprep.subr.mxu0 0.0
    %68 = vmatpush1.xpose.msra.mxu0 0.0
    %69 = vmatprep.subr.mxu0 0.0
    %70 = vmatpush1.xpose.msra.mxu0 0.0
    %71 = vmatprep.subr.mxu0 0.0
    %72 = vmatpush1.xpose.msra.mxu0 0.0
    %73 = vmatprep.subr.mxu0 0.0
    %74 = vmatpush1.xpose.msra.mxu0 0.0
    %75 = vmatprep.subr.mxu0 0.0
    %76 = vmatpush1.xpose.msra.mxu0 0.0
    %77 = vmatprep.subr.mxu0 0.0
    %78 = vmatpush1.xpose.msra.mxu0 0.0
    %79 = vmatprep.subr.mxu0 0.0
    %80 = vmatpush1.xpose.msra.mxu0 0.0
    %81 = vmatprep.subr.mxu0 0.0
    %82 = vmatpush1.xpose.msra.mxu0 0.0
    %83 = vmatprep.subr.mxu0 0.0
    %84 = vmatpush1.xpose.msra.mxu0 0.0
    %85 = vmatprep.subr.mxu0 0.0
    %86 = vmatpush1.xpose.msra.mxu0 0.0
    %87 = vmatprep.subr.mxu0 0.0
    %88 = vmatpush1.xpose.msra.mxu0 0.0
    %89 = vmatprep.subr.mxu0 0.0
    %90 = vmatpush1.xpose.msra.mxu0 0.0
    %91 = vmatprep.subr.mxu0 0.0
    %92 = vmatpush1.xpose.msra.mxu0 0.0
    %93 = vmatprep.subr.mxu0 0.0
    %94 = vmatpush1.xpose.msra.mxu0 0.0
    %95 = vmatprep.subr.mxu0 0.0
    %96 = vmatpush1.xpose.msra.mxu0 0.0
    %97 = vmatprep.subr.mxu0 0.0
    %98 = vmatpush1.xpose.msra.mxu0 0.0
    %99 = vmatprep.subr.mxu0 0.0
    %100 = vmatpush1.xpose.msra.mxu0 0.0
    %101 = vmatprep.subr.mxu0 0.0
    %102 = vmatpush1.xpose.msra.mxu0 0.0
    %103 = vmatprep.subr.mxu0 0.0
    %104 = vmatpush1.xpose.msra.mxu0 0.0
    %105 = vmatprep.mubr.f32.mxu0 0.0
    %106 = vmatmul.mubr.f32.gmra.mrb[0].mxu0 %v39
    %v107 = vpop.f32.mrb[0].mxu0
    %v108 = vadd.f32 0.0, %v107
    %v109 = vpop.f32.mrb[0].mxu0
    %110 = vdwg.mxu0
    %v112 = vsel %vm30, %v28, 0
    %114 = vmatprep.subr.mxu0 0.0
    %115 = vmatpush1.xpose.msra.mxu0 %v112
    %116 = vmatprep.subr.mxu0 0.0
    %117 = vmatpush1.xpose.msra.mxu0 0.0
    %118 = vmatprep.subr.mxu0 0.0
    %119 = vmatpush1.xpose.msra.mxu0 0.0
    %120 = vmatprep.subr.mxu0 0.0
    %121 = vmatpush1.xpose.msra.mxu0 0.0
    %122 = vmatprep.subr.mxu0 0.0
    %123 = vmatpush1.xpose.msra.mxu0 0.0
    %124 = vmatprep.subr.mxu0 0.0
    %125 = vmatpush1.xpose.msra.mxu0 0.0
    %126 = vmatprep.subr.mxu0 0.0
    %127 = vmatpush1.xpose.msra.mxu0 0.0
    %128 = vmatprep.subr.mxu0 0.0
    %129 = vmatpush1.xpose.msra.mxu0 0.0
    %130 = vmatprep.subr.mxu0 0.0
    %131 = vmatpush1.xpose.msra.mxu0 0.0
    %132 = vmatprep.subr.mxu0 0.0
    %133 = vmatpush1.xpose.msra.mxu0 0.0
    %134 = vmatprep.subr.mxu0 0.0
    %135 = vmatpush1.xpose.msra.mxu0 0.0
    %136 = vmatprep.subr.mxu0 0.0
    %137 = vmatpush1.xpose.msra.mxu0 0.0
    %138 = vmatprep.subr.mxu0 0.0
    %139 = vmatpush1.xpose.msra.mxu0 0.0
    %140 = vmatprep.subr.mxu0 0.0
    %141 = vmatpush1.xpose.msra.mxu0 0.0
    %142 = vmatprep.subr.mxu0 0.0
    %143 = vmatpush1.xpose.msra.mxu0 0.0
    %144 = vmatprep.subr.mxu0 0.0
    %145 = vmatpush1.xpose.msra.mxu0 0.0
    %146 = vmatprep.subr.mxu0 0.0
    %147 = vmatpush1.xpose.msra.mxu0 0.0
    %148 = vmatprep.subr.mxu0 0.0
    %149 = vmatpush1.xpose.msra.mxu0 0.0
    %150 = vmatprep.subr.mxu0 0.0
    %151 = vmatpush1.xpose.msra.mxu0 0.0
    %152 = vmatprep.subr.mxu0 0.0
    %153 = vmatpush1.xpose.msra.mxu0 0.0
    %154 = vmatprep.subr.mxu0 0.0
    %155 = vmatpush1.xpose.msra.mxu0 0.0
    %156 = vmatprep.subr.mxu0 0.0
    %157 = vmatpush1.xpose.msra.mxu0 0.0
    %158 = vmatprep.subr.mxu0 0.0
    %159 = vmatpush1.xpose.msra.mxu0 0.0
    %160 = vmatprep.subr.mxu0 0.0
    %161 = vmatpush1.xpose.msra.mxu0 0.0
    %162 = vmatprep.subr.mxu0 0.0
    %163 = vmatpush1.xpose.msra.mxu0 0.0
    %164 = vmatprep.subr.mxu0 0.0
    %165 = vmatpush1.xpose.msra.mxu0 0.0
    %166 = vmatprep.subr.mxu0 0.0
    %167 = vmatpush1.xpose.msra.mxu0 0.0
    %168 = vmatprep.subr.mxu0 0.0
    %169 = vmatpush1.xpose.msra.mxu0 0.0
    %170 = vmatprep.subr.mxu0 0.0
    %171 = vmatpush1.xpose.msra.mxu0 0.0
    %172 = vmatprep.subr.mxu0 0.0
    %173 = vmatpush1.xpose.msra.mxu0 0.0
    %174 = vmatprep.subr.mxu0 0.0
    %175 = vmatpush1.xpose.msra.mxu0 0.0
    %176 = vmatprep.subr.mxu0 0.0
    %177 = vmatpush1.xpose.msra.mxu0 0.0
    %178 = vmatprep.mubr.f32.mxu0 0.0
    %179 = vmatmul.mubr.f32.gmra.mrb[0].mxu0 %v112
    %v180 = vpop.f32.mrb[0].mxu0
    %v181 = vadd.f32 0.0, %v180
    %v182 = vpop.f32.mrb[0].mxu0
    %183 = vdwg.mxu0
    %184 = vmatprep.subr.mxu0 0.0
    %185 = vmatpush1.xpose.msra.mxu0 %v112
    %186 = vmatprep.subr.mxu0 0.0
    %187 = vmatpush1.xpose.msra.mxu0 0.0
    %188 = vmatprep.subr.mxu0 0.0
    %189 = vmatpush1.xpose.msra.mxu0 0.0
    %190 = vmatprep.subr.mxu0 0.0
    %191 = vmatpush1.xpose.msra.mxu0 0.0
    %192 = vmatprep.subr.mxu0 0.0
    %193 = vmatpush1.xpose.msra.mxu0 0.0
    %194 = vmatprep.subr.mxu0 0.0
    %195 = vmatpush1.xpose.msra.mxu0 0.0
    %196 = vmatprep.subr.mxu0 0.0
    %197 = vmatpush1.xpose.msra.mxu0 0.0
    %198 = vmatprep.subr.mxu0 0.0
    %199 = vmatpush1.xpose.msra.mxu0 0.0
    %200 = vmatprep.subr.mxu0 0.0
    %201 = vmatpush1.xpose.msra.mxu0 0.0
    %202 = vmatprep.subr.mxu0 0.0
    %203 = vmatpush1.xpose.msra.mxu0 0.0
    %204 = vmatprep.subr.mxu0 0.0
    %205 = vmatpush1.xpose.msra.mxu0 0.0
    %206 = vmatprep.subr.mxu0 0.0
    %207 = vmatpush1.xpose.msra.mxu0 0.0
    %208 = vmatprep.subr.mxu0 0.0
    %209 = vmatpush1.xpose.msra.mxu0 0.0
    %210 = vmatprep.subr.mxu0 0.0
    %211 = vmatpush1.xpose.msra.mxu0 0.0
    %212 = vmatprep.subr.mxu0 0.0
    %213 = vmatpush1.xpose.msra.mxu0 0.0
    %214 = vmatprep.subr.mxu0 0.0
    %215 = vmatpush1.xpose.msra.mxu0 0.0
    %216 = vmatprep.subr.mxu0 0.0
    %217 = vmatpush1.xpose.msra.mxu0 0.0
    %218 = vmatprep.subr.mxu0 0.0
    %219 = vmatpush1.xpose.msra.mxu0 0.0
    %220 = vmatprep.subr.mxu0 0.0
    %221 = vmatpush1.xpose.msra.mxu0 0.0
    %222 = vmatprep.subr.mxu0 0.0
    %223 = vmatpush1.xpose.msra.mxu0 0.0
    %224 = vmatprep.subr.mxu0 0.0
    %225 = vmatpush1.xpose.msra.mxu0 0.0
    %226 = vmatprep.subr.mxu0 0.0
    %227 = vmatpush1.xpose.msra.mxu0 0.0
    %228 = vmatprep.subr.mxu0 0.0
    %229 = vmatpush1.xpose.msra.mxu0 0.0
    %230 = vmatprep.subr.mxu0 0.0
    %231 = vmatpush1.xpose.msra.mxu0 0.0
    %232 = vmatprep.subr.mxu0 0.0
    %233 = vmatpush1.xpose.msra.mxu0 0.0
    %234 = vmatprep.subr.mxu0 0.0
    %235 = vmatpush1.xpose.msra.mxu0 0.0
    %236 = vmatprep.subr.mxu0 0.0
    %237 = vmatpush1.xpose.msra.mxu0 0.0
    %238 = vmatprep.subr.mxu0 0.0
    %239 = vmatpush1.xpose.msra.mxu0 0.0
    %240 = vmatprep.subr.mxu0 0.0
    %241 = vmatpush1.xpose.msra.mxu0 0.0
    %242 = vmatprep.subr.mxu0 0.0
    %243 = vmatpush1.xpose.msra.mxu0 0.0
    %244 = vmatprep.subr.mxu0 0.0
    %245 = vmatpush1.xpose.msra.mxu0 0.0
    %246 = vmatprep.subr.mxu0 0.0
    %247 = vmatpush1.xpose.msra.mxu0 0.0
    %248 = vmatprep.mubr.f32.mxu0 0.0
    %249 = vmatmul.mubr.f32.gmra.mrb[0].mxu0 %v39
    %v250 = vpop.f32.mrb[0].mxu0
    %v251 = vadd.f32 0.0, %v250
    %v252 = vpop.f32.mrb[0].mxu0
    %253 = vdwg.mxu0
    %254 = vxpose.xlu0.b32.start [1/16] %v33, 128
    %255 = vxpose.xlu0.b32.cont [2/16] 0.0, 128
    %256 = vxpose.xlu0.b32.cont [3/16] 0.0, 128
    %257 = vxpose.xlu0.b32.cont [4/16] 0.0, 128
    %258 = vxpose.xlu0.b32.cont [5/16] 0.0, 128
    %259 = vxpose.xlu0.b32.cont [6/16] 0.0, 128
    %260 = vxpose.xlu0.b32.cont [7/16] 0.0, 128
    %261 = vxpose.xlu0.b32.cont [8/16] 0.0, 128
    %262 = vxpose.xlu0.b32.cont [9/16] 0.0, 128
    %263 = vxpose.xlu0.b32.cont [10/16] 0.0, 128
    %264 = vxpose.xlu0.b32.cont [11/16] 0.0, 128
    %265 = vxpose.xlu0.b32.cont [12/16] 0.0, 128
    %266 = vxpose.xlu0.b32.cont [13/16] 0.0, 128
    %267 = vxpose.xlu0.b32.cont [14/16] 0.0, 128
    %268 = vxpose.xlu0.b32.cont [15/16] 0.0, 128
    %269 = vxpose.xlu0.b32.end [16/16] 0.0, 128
    %v270 = vpop.trf.xlu0
    %v271 = vpop.trf.xlu0
    %v272 = vpop.trf.xlu0
    %v273 = vpop.trf.xlu0
    %v274 = vpop.trf.xlu0
    %v275 = vpop.trf.xlu0
    %v276 = vpop.trf.xlu0
    %v277 = vpop.trf.xlu0
    %v278 = vpop.trf.xlu0
    %v279 = vpop.trf.xlu0
    %v280 = vpop.trf.xlu0
    %v281 = vpop.trf.xlu0
    %v282 = vpop.trf.xlu0
    %v283 = vpop.trf.xlu0
    %v284 = vpop.trf.xlu0
    %v285 = vpop.trf.xlu0
    %v286 = vlaneseq
    %v287 = vshrl.u32 %v286, 7
    %v288 = vsub.s32 0, %v287
    %v289 = vrot.slane %v270, %v288
    %v290 = vadd.f32 %v33, %v289
    %v291 = vmul.f32 %v108, 2.0
    %v292 = vsub.f32 %v290, %v291
    %v293 = vmax.f32 %v292, 0.0
    %294 = vxpose.xlu0.b32.start [1/16] %v37, 128
    %295 = vxpose.xlu0.b32.cont [2/16] 0.0, 128
    %296 = vxpose.xlu0.b32.cont [3/16] 0.0, 128
    %297 = vxpose.xlu0.b32.cont [4/16] 0.0, 128
    %298 = vxpose.xlu0.b32.cont [5/16] 0.0, 128
    %299 = vxpose.xlu0.b32.cont [6/16] 0.0, 128
    %300 = vxpose.xlu0.b32.cont [7/16] 0.0, 128
    %301 = vxpose.xlu0.b32.cont [8/16] 0.0, 128
    %302 = vxpose.xlu0.b32.cont [9/16] 0.0, 128
    %303 = vxpose.xlu0.b32.cont [10/16] 0.0, 128
    %304 = vxpose.xlu0.b32.cont [11/16] 0.0, 128
    %305 = vxpose.xlu0.b32.cont [12/16] 0.0, 128
    %306 = vxpose.xlu0.b32.cont [13/16] 0.0, 128
    %307 = vxpose.xlu0.b32.cont [14/16] 0.0, 128
    %308 = vxpose.xlu0.b32.cont [15/16] 0.0, 128
    %309 = vxpose.xlu0.b32.end [16/16] 0.0, 128
    %v310 = vpop.trf.xlu0
    %v311 = vpop.trf.xlu0
    %v312 = vpop.trf.xlu0
    %v313 = vpop.trf.xlu0
    %v314 = vpop.trf.xlu0
    %v315 = vpop.trf.xlu0
    %v316 = vpop.trf.xlu0
    %v317 = vpop.trf.xlu0
    %v318 = vpop.trf.xlu0
    %v319 = vpop.trf.xlu0
    %v320 = vpop.trf.xlu0
    %v321 = vpop.trf.xlu0
    %v322 = vpop.trf.xlu0
    %v323 = vpop.trf.xlu0
    %v324 = vpop.trf.xlu0
    %v325 = vpop.trf.xlu0
    %v326 = vlaneseq
    %v327 = vshrl.u32 %v326, 7
    %v328 = vsub.s32 0, %v327
    %v329 = vrot.slane %v310, %v328
    %v330 = vadd.f32 %v37, %v329
    %v331 = vmul.f32 %v181, 2.0
    %v332 = vsub.f32 %v330, %v331
    %v333 = vmax.f32 %v332, 0.0
    %v334 = vadd.f32 %v33, %v329
    %v335 = vmul.f32 %v251, 2.0
    %v336 = vsub.f32 %v334, %v335
    %v337 = vmax.f32 %v336, 0.0
    %vm338 = vcmask 7168
    %v339 = vsel %vm338, %v33, 0.0
    %340 = vadd.xlane.f32.xlu0 %v339
    %v341 = vpop.xlane.xlu0 %340
    %v342 = vrot.slane %v341, 4
    %v343 = vadd.f32 %v341, %v342
    %v344 = vrot.slane %v343, 2
    %v345 = vadd.f32 %v343, %v344
    %v346 = vrot.slane %v345, 1
    %v347 = vadd.f32 %v345, %v346
    %s348 = vtos %v347
    %v349 = vsel %vm338, %v37, 0.0
    %350 = vadd.xlane.f32.xlu0 %v349
    %v351 = vpop.xlane.xlu0 %350
    %v352 = vrot.slane %v351, 4
    %v353 = vadd.f32 %v351, %v352
    %v354 = vrot.slane %v353, 2
    %v355 = vadd.f32 %v353, %v354
    %v356 = vrot.slane %v355, 1
    %v357 = vadd.f32 %v355, %v356
    %s358 = vtos %v357
    %s359 = sadd.f32 %s348, %s358
    %v360 = vsel %vm30, %v27, 0.0
    %v361 = vrot.slane %v360, 4
    %v362 = vadd.f32 %v360, %v361
    %v363 = vrot.slane %v362, 2
    %v364 = vadd.f32 %v362, %v363
    %v365 = vrot.slane %v364, 1
    %v366 = vadd.f32 %v364, %v365
    %v367 = vsel %vm30, %v28, 0.0
    %v368 = vrot.slane %v367, 4
    %v369 = vadd.f32 %v367, %v368
    %v370 = vrot.slane %v369, 2
    %v371 = vadd.f32 %v369, %v370
    %v372 = vrot.slane %v371, 1
    %v373 = vadd.f32 %v371, %v372
    %v374 = vadd.f32 %v366, %v373
    %s375 = smul.f32 %s359, 32.0
    %v376 = vmul.f32 %v374, %v374
    %vm377 = vcmask 253952
    %v378 = vsel %vm377, %v376, 0.0
    %379 = vadd.xlane.f32.xlu0 %v378
    %v380 = vpop.xlane.xlu0 %379
    %v381 = vrot.slane %v380, 4
    %v382 = vadd.f32 %v380, %v381
    %v383 = vrot.slane %v382, 2
    %v384 = vadd.f32 %v382, %v383
    %v385 = vrot.slane %v384, 1
    %v386 = vadd.f32 %v384, %v385
    %s387 = vtos %v386
    %s388 = smul.f32 %s387, 2.0
    %s389 = ssub.f32 %s375, %s388
    %s390 = smax.f32 %s389, 0.0
    %v391 = vrcp.pop 240.0
    %s392 = vtos %v391
    %s393 = smul.f32 %s390, %s392
    %v394 = vrcp.pop 4.0
    %s395 = vtos %v394
    %s396 = smul.f32 %s393, %s395
    %v397 = vstv %s396
    %v398 = vrcp.pop %v397
    %s399 = vtos %v398
    %s400 = smul.f32 %s399, -0.0625
    %v401 = vstv %s400
    %v402 = vmul.f32 %v293, %v401
    %v403 = vmul.f32 %v402, 1.442695
    %v404 = vpow.pop %v403
    %v405 = vmul.f32 %v404, %v404
    %v406 = vadd.f32 %v404, %v405
    %v407 = vmul.f32 %v405, %v405
    %v408 = vadd.f32 %v406, %v407
    %v409 = vmul.f32 %v407, %v407
    %v410 = vadd.f32 %v408, %v409
    %v411 = vmul.f32 %v409, %v409
    %v412 = vadd.f32 %v410, %v411
    %v413 = vmul.f32 %v333, %v401
    %v414 = vmul.f32 %v413, 1.442695
    %v415 = vpow.pop %v414
    %v416 = vmul.f32 %v415, %v415
    %v417 = vadd.f32 %v415, %v416
    %v418 = vmul.f32 %v416, %v416
    %v419 = vadd.f32 %v417, %v418
    %v420 = vmul.f32 %v418, %v418
    %v421 = vadd.f32 %v419, %v420
    %v422 = vmul.f32 %v420, %v420
    %v423 = vadd.f32 %v421, %v422
    %v424 = vmul.f32 %v337, %v401
    %v425 = vmul.f32 %v424, 1.442695
    %v426 = vpow.pop %v425
    %v427 = vmul.f32 %v426, %v426
    %v428 = vadd.f32 %v426, %v427
    %v429 = vmul.f32 %v427, %v427
    %v430 = vadd.f32 %v428, %v429
    %v431 = vmul.f32 %v429, %v429
    %v432 = vadd.f32 %v430, %v431
    %v433 = vmul.f32 %v431, %v431
    %v434 = vadd.f32 %v432, %v433
    %v435 = vld [vmem:[%s2] sm:$0xff]
    %v436 = vld [vmem:[%s3] sm:$0xff]
    %vm437 = vcmask 31744
    %v439 = vsel %vm437, %v435, 0
    %v442 = vsel %vm437, %v436, 0
    %444 = vmatprep.subr.mxu0 0.0
    %445 = vmatpush1.xpose.msra.mxu0 %v442
    %446 = vmatprep.subr.mxu0 0.0
    %447 = vmatpush1.xpose.msra.mxu0 0.0
    %448 = vmatprep.subr.mxu0 0.0
    %449 = vmatpush1.xpose.msra.mxu0 0.0
    %450 = vmatprep.subr.mxu0 0.0
    %451 = vmatpush1.xpose.msra.mxu0 0.0
    %452 = vmatprep.subr.mxu0 0.0
    %453 = vmatpush1.xpose.msra.mxu0 0.0
    %454 = vmatprep.subr.mxu0 0.0
    %455 = vmatpush1.xpose.msra.mxu0 0.0
    %456 = vmatprep.subr.mxu0 0.0
    %457 = vmatpush1.xpose.msra.mxu0 0.0
    %458 = vmatprep.subr.mxu0 0.0
    %459 = vmatpush1.xpose.msra.mxu0 0.0
    %460 = vmatprep.subr.mxu0 0.0
    %461 = vmatpush1.xpose.msra.mxu0 0.0
    %462 = vmatprep.subr.mxu0 0.0
    %463 = vmatpush1.xpose.msra.mxu0 0.0
    %464 = vmatprep.subr.mxu0 0.0
    %465 = vmatpush1.xpose.msra.mxu0 0.0
    %466 = vmatprep.subr.mxu0 0.0
    %467 = vmatpush1.xpose.msra.mxu0 0.0
    %468 = vmatprep.subr.mxu0 0.0
    %469 = vmatpush1.xpose.msra.mxu0 0.0
    %470 = vmatprep.subr.mxu0 0.0
    %471 = vmatpush1.xpose.msra.mxu0 0.0
    %472 = vmatprep.subr.mxu0 0.0
    %473 = vmatpush1.xpose.msra.mxu0 0.0
    %474 = vmatprep.subr.mxu0 0.0
    %475 = vmatpush1.xpose.msra.mxu0 0.0
    %476 = vmatprep.subr.mxu0 0.0
    %477 = vmatpush1.xpose.msra.mxu0 0.0
    %478 = vmatprep.subr.mxu0 0.0
    %479 = vmatpush1.xpose.msra.mxu0 0.0
    %480 = vmatprep.subr.mxu0 0.0
    %481 = vmatpush1.xpose.msra.mxu0 0.0
    %482 = vmatprep.subr.mxu0 0.0
    %483 = vmatpush1.xpose.msra.mxu0 0.0
    %484 = vmatprep.subr.mxu0 0.0
    %485 = vmatpush1.xpose.msra.mxu0 0.0
    %486 = vmatprep.subr.mxu0 0.0
    %487 = vmatpush1.xpose.msra.mxu0 0.0
    %488 = vmatprep.subr.mxu0 0.0
    %489 = vmatpush1.xpose.msra.mxu0 0.0
    %490 = vmatprep.subr.mxu0 0.0
    %491 = vmatpush1.xpose.msra.mxu0 0.0
    %492 = vmatprep.subr.mxu0 0.0
    %493 = vmatpush1.xpose.msra.mxu0 0.0
    %494 = vmatprep.subr.mxu0 0.0
    %495 = vmatpush1.xpose.msra.mxu0 0.0
    %496 = vmatprep.subr.mxu0 0.0
    %497 = vmatpush1.xpose.msra.mxu0 0.0
    %498 = vmatprep.subr.mxu0 0.0
    %499 = vmatpush1.xpose.msra.mxu0 0.0
    %500 = vmatprep.subr.mxu0 0.0
    %501 = vmatpush1.xpose.msra.mxu0 0.0
    %502 = vmatprep.subr.mxu0 0.0
    %503 = vmatpush1.xpose.msra.mxu0 0.0
    %504 = vmatprep.subr.mxu0 0.0
    %505 = vmatpush1.xpose.msra.mxu0 0.0
    %506 = vmatprep.subr.mxu0 0.0
    %507 = vmatpush1.xpose.msra.mxu0 0.0
    %508 = vmatprep.mubr.f32.mxu0 0.0
    %509 = vmatmul.mubr.f32.gmra.mrb[0].mxu0 %v439
    %v510 = vpop.f32.mrb[0].mxu0
    %v511 = vadd.f32 0.0, %v510
    %v512 = vpop.f32.mrb[0].mxu0
    %513 = vdwg.mxu0
    %v514 = vld [vmem:[%s4] sm:$0xff]
    %v515 = vld [vmem:[%s5] sm:$0xff]
    %v517 = vsel %vm437, %v514, 0
    %v520 = vsel %vm437, %v515, 0
    %522 = vmatprep.subr.mxu0 0.0
    %523 = vmatpush1.xpose.msra.mxu0 %v520
    %524 = vmatprep.subr.mxu0 0.0
    %525 = vmatpush1.xpose.msra.mxu0 0.0
    %526 = vmatprep.subr.mxu0 0.0
    %527 = vmatpush1.xpose.msra.mxu0 0.0
    %528 = vmatprep.subr.mxu0 0.0
    %529 = vmatpush1.xpose.msra.mxu0 0.0
    %530 = vmatprep.subr.mxu0 0.0
    %531 = vmatpush1.xpose.msra.mxu0 0.0
    %532 = vmatprep.subr.mxu0 0.0
    %533 = vmatpush1.xpose.msra.mxu0 0.0
    %534 = vmatprep.subr.mxu0 0.0
    %535 = vmatpush1.xpose.msra.mxu0 0.0
    %536 = vmatprep.subr.mxu0 0.0
    %537 = vmatpush1.xpose.msra.mxu0 0.0
    %538 = vmatprep.subr.mxu0 0.0
    %539 = vmatpush1.xpose.msra.mxu0 0.0
    %540 = vmatprep.subr.mxu0 0.0
    %541 = vmatpush1.xpose.msra.mxu0 0.0
    %542 = vmatprep.subr.mxu0 0.0
    %543 = vmatpush1.xpose.msra.mxu0 0.0
    %544 = vmatprep.subr.mxu0 0.0
    %545 = vmatpush1.xpose.msra.mxu0 0.0
    %546 = vmatprep.subr.mxu0 0.0
    %547 = vmatpush1.xpose.msra.mxu0 0.0
    %548 = vmatprep.subr.mxu0 0.0
    %549 = vmatpush1.xpose.msra.mxu0 0.0
    %550 = vmatprep.subr.mxu0 0.0
    %551 = vmatpush1.xpose.msra.mxu0 0.0
    %552 = vmatprep.subr.mxu0 0.0
    %553 = vmatpush1.xpose.msra.mxu0 0.0
    %554 = vmatprep.subr.mxu0 0.0
    %555 = vmatpush1.xpose.msra.mxu0 0.0
    %556 = vmatprep.subr.mxu0 0.0
    %557 = vmatpush1.xpose.msra.mxu0 0.0
    %558 = vmatprep.subr.mxu0 0.0
    %559 = vmatpush1.xpose.msra.mxu0 0.0
    %560 = vmatprep.subr.mxu0 0.0
    %561 = vmatpush1.xpose.msra.mxu0 0.0
    %562 = vmatprep.subr.mxu0 0.0
    %563 = vmatpush1.xpose.msra.mxu0 0.0
    %564 = vmatprep.subr.mxu0 0.0
    %565 = vmatpush1.xpose.msra.mxu0 0.0
    %566 = vmatprep.subr.mxu0 0.0
    %567 = vmatpush1.xpose.msra.mxu0 0.0
    %568 = vmatprep.subr.mxu0 0.0
    %569 = vmatpush1.xpose.msra.mxu0 0.0
    %570 = vmatprep.subr.mxu0 0.0
    %571 = vmatpush1.xpose.msra.mxu0 0.0
    %572 = vmatprep.subr.mxu0 0.0
    %573 = vmatpush1.xpose.msra.mxu0 0.0
    %574 = vmatprep.subr.mxu0 0.0
    %575 = vmatpush1.xpose.msra.mxu0 0.0
    %576 = vmatprep.subr.mxu0 0.0
    %577 = vmatpush1.xpose.msra.mxu0 0.0
    %578 = vmatprep.subr.mxu0 0.0
    %579 = vmatpush1.xpose.msra.mxu0 0.0
    %580 = vmatprep.subr.mxu0 0.0
    %581 = vmatpush1.xpose.msra.mxu0 0.0
    %582 = vmatprep.subr.mxu0 0.0
    %583 = vmatpush1.xpose.msra.mxu0 0.0
    %584 = vmatprep.subr.mxu0 0.0
    %585 = vmatpush1.xpose.msra.mxu0 0.0
    %586 = vmatprep.mubr.f32.mxu0 0.0
    %587 = vmatmul.mubr.f32.gmra.mrb[0].mxu0 %v517
    %v588 = vpop.f32.mrb[0].mxu0
    %v589 = vadd.f32 0.0, %v588
    %v590 = vpop.f32.mrb[0].mxu0
    %591 = vdwg.mxu0
    %592 = vmatprep.subr.mxu0 0.0
    %593 = vmatpush1.xpose.msra.mxu0 %v520
    %594 = vmatprep.subr.mxu0 0.0
    %595 = vmatpush1.xpose.msra.mxu0 0.0
    %596 = vmatprep.subr.mxu0 0.0
    %597 = vmatpush1.xpose.msra.mxu0 0.0
    %598 = vmatprep.subr.mxu0 0.0
    %599 = vmatpush1.xpose.msra.mxu0 0.0
    %600 = vmatprep.subr.mxu0 0.0
    %601 = vmatpush1.xpose.msra.mxu0 0.0
    %602 = vmatprep.subr.mxu0 0.0
    %603 = vmatpush1.xpose.msra.mxu0 0.0
    %604 = vmatprep.subr.mxu0 0.0
    %605 = vmatpush1.xpose.msra.mxu0 0.0
    %606 = vmatprep.subr.mxu0 0.0
    %607 = vmatpush1.xpose.msra.mxu0 0.0
    %608 = vmatprep.subr.mxu0 0.0
    %609 = vmatpush1.xpose.msra.mxu0 0.0
    %610 = vmatprep.subr.mxu0 0.0
    %611 = vmatpush1.xpose.msra.mxu0 0.0
    %612 = vmatprep.subr.mxu0 0.0
    %613 = vmatpush1.xpose.msra.mxu0 0.0
    %614 = vmatprep.subr.mxu0 0.0
    %615 = vmatpush1.xpose.msra.mxu0 0.0
    %616 = vmatprep.subr.mxu0 0.0
    %617 = vmatpush1.xpose.msra.mxu0 0.0
    %618 = vmatprep.subr.mxu0 0.0
    %619 = vmatpush1.xpose.msra.mxu0 0.0
    %620 = vmatprep.subr.mxu0 0.0
    %621 = vmatpush1.xpose.msra.mxu0 0.0
    %622 = vmatprep.subr.mxu0 0.0
    %623 = vmatpush1.xpose.msra.mxu0 0.0
    %624 = vmatprep.subr.mxu0 0.0
    %625 = vmatpush1.xpose.msra.mxu0 0.0
    %626 = vmatprep.subr.mxu0 0.0
    %627 = vmatpush1.xpose.msra.mxu0 0.0
    %628 = vmatprep.subr.mxu0 0.0
    %629 = vmatpush1.xpose.msra.mxu0 0.0
    %630 = vmatprep.subr.mxu0 0.0
    %631 = vmatpush1.xpose.msra.mxu0 0.0
    %632 = vmatprep.subr.mxu0 0.0
    %633 = vmatpush1.xpose.msra.mxu0 0.0
    %634 = vmatprep.subr.mxu0 0.0
    %635 = vmatpush1.xpose.msra.mxu0 0.0
    %636 = vmatprep.subr.mxu0 0.0
    %637 = vmatpush1.xpose.msra.mxu0 0.0
    %638 = vmatprep.subr.mxu0 0.0
    %639 = vmatpush1.xpose.msra.mxu0 0.0
    %640 = vmatprep.subr.mxu0 0.0
    %641 = vmatpush1.xpose.msra.mxu0 0.0
    %642 = vmatprep.subr.mxu0 0.0
    %643 = vmatpush1.xpose.msra.mxu0 0.0
    %644 = vmatprep.subr.mxu0 0.0
    %645 = vmatpush1.xpose.msra.mxu0 0.0
    %646 = vmatprep.subr.mxu0 0.0
    %647 = vmatpush1.xpose.msra.mxu0 0.0
    %648 = vmatprep.subr.mxu0 0.0
    %649 = vmatpush1.xpose.msra.mxu0 0.0
    %650 = vmatprep.subr.mxu0 0.0
    %651 = vmatpush1.xpose.msra.mxu0 0.0
    %652 = vmatprep.subr.mxu0 0.0
    %653 = vmatpush1.xpose.msra.mxu0 0.0
    %654 = vmatprep.subr.mxu0 0.0
    %655 = vmatpush1.xpose.msra.mxu0 0.0
    %656 = vmatprep.mubr.f32.mxu0 0.0
    %657 = vmatmul.mubr.f32.gmra.mrb[0].mxu0 %v439
    %v658 = vpop.f32.mrb[0].mxu0
    %v659 = vadd.f32 0.0, %v658
    %v660 = vpop.f32.mrb[0].mxu0
    %661 = vdwg.mxu0
    %v662 = vld [vmem:[%s6] sm:$0xff]
    %v663 = vmul.f32 %v662, 3.0
    %v664 = vxor.u32 %v663, 2147483648
    %v665 = vmul.f32 %v664, 1.442695
    %v666 = vpow.pop %v665
    %v667 = vadd.f32 %v666, 1.0
    %v668 = vrcp.pop %v667
    %v669 = vmul.f32 1.0, %v668
    %671 = vset.pattern.permute.xlu0 0
    %672 = vperm.xlu0 %671, %v669
    %v673 = vpop.permute.xlu0 %672
    %v675 = vmul.f32 %v673, %v511
    %v676 = vmul.f32 %v675, %v412
    %v677 = vmul.f32 %v589, %v423
    %v678 = vadd.f32 %v676, %v677
    %v679 = vrsqrt.pop %v669
    %v680 = vmul.f32 %v669, %v679
    %vm681 = vcmp.eq.f32.partialorder %v669, inf
    %v682 = vsel %vm681, %v669, %v680
    %vm683 = vcmp.eq.f32.partialorder %v669, 0.0
    %v684 = vand.u32 %v669, 2147483648
    %v685 = vsel %vm683, %v684, %v682
    %v686 = vmul.f32 %v685, 2.0
    %688 = vset.pattern.permute.xlu0 0
    %689 = vperm.xlu0 %688, %v686
    %v690 = vpop.permute.xlu0 %689
    %v692 = vmul.f32 %v690, %v659
    %v693 = vmul.f32 %v692, %v434
    %v694 = vsub.f32 %v678, %v693
    %vm695 = vcmask 64512
    %v696 = vsel %vm695, %v694, 0.0
    %697 = vadd.xlane.f32.xlu0 %v696
    %v698 = vpop.xlane.xlu0 %697
    %v699 = vrot.slane %v698, 4
    %v700 = vadd.f32 %v698, %v699
    %v701 = vrot.slane %v700, 2
    %v702 = vadd.f32 %v700, %v701
    %v703 = vrot.slane %v702, 1
    %v704 = vadd.f32 %v702, %v703
    %s705 = vtos %v704
    %p706 = scmp.ne.f32.partialorder %s705, %s705
    %s707 = scalar_select %p706, 0.0, %s705
    %s708 = scalar_lea.smem [#allocation2], 0
    %709 = sst [smem:[%s708]] %s707
    // Predicated region
    $region30: #{tpu_custom_call.1} parent=1 // pred_check
      _
    $region31: #{tpu_custom_call.1} parent=1 // pred_check_branch
      %711 = sbr.rel (0) target = $region33
    $region32: #{tpu_custom_call.1} parent=1 // pred_region
      %s713 = ssub.s32 16, 16
      %714 = vsyncadd [#allocation3], %s713
      %717 = dma.smem_to_hbm [#allocation2], 16, %s7, [#allocation3]
    $region33: #{tpu_custom_call.1} parent=1 // pred_fallthru
      _
    // Predicated region
    $region34: #{tpu_custom_call.1} parent=1 // pred_check
      _
    $region35: #{tpu_custom_call.1} parent=1 // pred_check_branch
      %719 = sbr.rel (0) target = $region37
    $region36: #{tpu_custom_call.1} parent=1 // pred_region
      %720 = dma.done [#allocation3], 16
    $region37: #{tpu_custom_call.1} parent=1 // pred_fallthru
      _
    %721 = sfence
    %722 = vsyncpa [#allocation3], 1

</llo_original>
